<compile_context>
chip_gen: v7x
topology: tpu7x:2x2x1
jax: 0.10.0
libtpu: 0.0.40
codegen_flags: <defaults>
</compile_context>

<pallas_src>
import jax
import jax.numpy as jnp
from jax.experimental import pallas as pl
from jax.experimental.pallas import tpu as pltpu


def _cdiv(a, b):
    return -(-a // b)


def _round_up(x, m):
    return _cdiv(x, m) * m


def _make_corr2d_kernel(kh, kw, tile_h, halo_h, out_w_blk, has_halo):
    """Kernel specialized for a static kernel size / tile geometry."""

    def accumulate(x, w, b):
        # x: (rows, width) f32 value, rows % 8 == 0, width % 128 == 0.
        #   acc[r, c] = b + sum_{di,dj} w[di][dj] * x[(r+di) % rows, (c+dj) % width]
        # Rows r >= rows-(kh-1) and cols c >= width-(kw-1) see wrapped data and
        # must not be trusted by the caller (they only ever land in dropped cells).
        rows, width = x.shape
        # Column (lane) shifts: one XLU rotation per dj, reused by every row tap.
        cols = [x]
        for dj in range(1, kw):
            cols.append(pltpu.roll(x, width - dj, axis=1))
        acc = None
        for di in range(kh):
            q = w[di][0] * cols[0]
            for dj in range(1, kw):
                q = q + w[di][dj] * cols[dj]
            if di == 0:
                acc = q + b                       # bias folded into first row tap
            else:
                acc = acc + pltpu.roll(q, rows - di, axis=0)
        return acc

    def read_scalars(w_ref, b_ref):
        # Hoisted SMEM scalar reads (once per tap, outside the VALU loop).
        w = [[w_ref[di, dj] for dj in range(kw)] for di in range(kh)]
        return w, b_ref[0]

    if has_halo:
        def kernel(x_ref, halo_ref, w_ref, b_ref, o_ref):
            w, b = read_scalars(w_ref, b_ref)
            if tile_h > halo_h:
                # Rows [0, tile_h-(kh-1)) are valid from the main block alone;
                # the bottom rows are overwritten below.
                acc_main = accumulate(x_ref[...], w, b)
                o_ref[...] = acc_main[:, :out_w_blk].astype(o_ref.dtype)
            # Bottom halo_h rows recomputed from a small strip that includes the
            # next tile's first halo_h rows (no full-tile concatenate).
            x_bot = jnp.concatenate(
                [x_ref[pl.ds(tile_h - halo_h, halo_h), :], halo_ref[...]], axis=0)
            acc_bot = accumulate(x_bot, w, b)
            o_ref[pl.ds(tile_h - halo_h, halo_h), :] = (
                acc_bot[:halo_h, :out_w_blk].astype(o_ref.dtype))
        return kernel

    def kernel(x_ref, w_ref, b_ref, o_ref):
        # kh == 1: no row tap crosses the tile boundary -> no halo stream at all.
        w, b = read_scalars(w_ref, b_ref)
        acc = accumulate(x_ref[...], w, b)
        o_ref[...] = acc[:, :out_w_blk].astype(o_ref.dtype)

    return kernel


def conv2d_pallas(x, weight, bias, *, tile_h_max=256, vmem_budget_bytes=40 << 20):
    """Pallas equivalent of Conv2D.forward: corr2d(x, weight) + bias."""
    x = jnp.asarray(x, jnp.float32)
    weight = jnp.asarray(weight, jnp.float32)
    bias = jnp.asarray(bias, jnp.float32).reshape((1,))

    H, W = x.shape
    kh, kw = weight.shape
    out_h, out_w = H - kh + 1, W - kw + 1
    assert out_h >= 1 and out_w >= 1, "kernel larger than input"

    # Halo strip height: multiple of 8 sublanes, >= kh - 1.
    halo_h = _round_up(max(kh - 1, 1), 8)
    # Lane-aligned *block* widths.  The arrays themselves are NOT padded: the
    # trailing partial lanes of a block are unspecified on read / dropped on
    # write and never feed a valid output cell.
    in_w_blk = _round_up(W, 128)
    out_w_blk = _round_up(out_w, 128)

    # ---- Row tiling ---------------------------------------------------------
    # Rough per-output-row VMEM bytes: double-buffered in/out blocks plus the
    # in-kernel temporaries (kw rolled copies + partial sum + accumulator).
    bytes_per_row = 4 * (2 * (in_w_blk + out_w_blk) + (kw + 2) * in_w_blk)
    cap = (vmem_budget_bytes // bytes_per_row) // halo_h * halo_h
    cap = max(halo_h, min(cap, _round_up(tile_h_max, halo_h)))
    n_tiles = _cdiv(out_h, cap)
    # Prefer an even grid of >= 2 steps when there is enough work: v7x shards a
    # "parallel" grid axis across its 2 TensorCores; the extra ~0.35us/step is
    # negligible on v5e/v6e.
    if n_tiles == 1 and out_h > halo_h:
        n_tiles = 2
    elif n_tiles > 1 and n_tiles % 2 == 1:
        n_tiles += 1
    tile_h = min(cap, _round_up(_cdiv(out_h, n_tiles), halo_h))
    grid_n = _cdiv(out_h, tile_h)

    has_halo = kh > 1
    kernel = _make_corr2d_kernel(kh, kw, tile_h, halo_h, out_w_blk, has_halo)

    in_specs = [pl.BlockSpec((tile_h, in_w_blk), lambda i: (i, 0))]
    operands = [x]
    if has_halo:
        bpt = tile_h // halo_h              # halo-height blocks per row tile
        last_blk = (H - 1) // halo_h        # last (partially) in-bounds halo block
        # First halo_h rows *after* this tile, clamped so the DMA never starts
        # past the array; when the clamp fires, the last tile provably does not
        # need halo data for any valid output row.
        in_specs.append(
            pl.BlockSpec((halo_h, in_w_blk),
                         lambda i: (jnp.minimum((i + 1) * bpt, last_blk), 0)))
        operands.append(x)
    in_specs += [
        pl.BlockSpec(memory_space=pltpu.MemorySpace.SMEM),   # weight (scalars)
        pl.BlockSpec(memory_space=pltpu.MemorySpace.SMEM),   # bias (scalar)
    ]
    operands += [weight, bias]

    return pl.pallas_call(
        kernel,
        out_shape=jax.ShapeDtypeStruct((out_h, out_w), jnp.float32),
        grid=(grid_n,),
        in_specs=in_specs,
        out_specs=pl.BlockSpec((tile_h, out_w_blk), lambda i: (i, 0)),
        compiler_params=pltpu.CompilerParams(
            dimension_semantics=("parallel",),
            # Above the 16/32 MiB scoped defaults (v5e/v6e), below v7x's 64 MiB.
            vmem_limit_bytes=48 * 1024 * 1024,
        ),
    )(*operands)


def _corr2d_reference(x, k, b):
    """Pure-JAX reference matching the PyTorch corr2d loop + bias."""
    kh, kw = k.shape
    out_h, out_w = x.shape[0] - kh + 1, x.shape[1] - kw + 1
    acc = jnp.full((out_h, out_w), b[0], jnp.float32)
    for di in range(kh):
        for dj in range(kw):
            acc = acc + k[di, dj] * x[di:di + out_h, dj:dj + out_w]
    return acc


if __name__ == "__main__":
    key = jax.random.PRNGKey(0)
    k_w, k_b, k_x = jax.random.split(key, 3)

    # Case 1: random 2x2 kernel on a non-aligned input -> 2-step halo'd grid.
    weight = jax.random.normal(k_w, (2, 2), dtype=jnp.float32)
    bias = jax.random.normal(k_b, (1,), dtype=jnp.float32)
    x = jax.random.normal(k_x, (30, 41), dtype=jnp.float32)

    y = conv2d_pallas(x, weight, bias)
    jax.block_until_ready(y)
    y_ref = _corr2d_reference(x, weight, bias)
    assert y.shape == (29, 40)
    assert jnp.allclose(y, y_ref, atol=1e-5, rtol=1e-5)

    # Case 2: same problem with forced 8-row tiles -> 4-step grid, exercising the
    # clamped last-tile halo block.
    y_tiled = conv2d_pallas(x, weight, bias, tile_h_max=8)
    jax.block_until_ready(y_tiled)
    assert jnp.allclose(y_tiled, y_ref, atol=1e-5, rtol=1e-5)

    # Case 3: the classic edge-detection example from the spec (K = [[1, -1]]).
    k2 = jnp.array([[1.0, -1.0]], dtype=jnp.float32)
    b2 = jnp.zeros((1,), dtype=jnp.float32)
    x2 = jnp.ones((6, 8), dtype=jnp.float32)
    y2 = conv2d_pallas(x2, k2, b2)
    jax.block_until_ready(y2)
    assert y2.shape == (6, 7)
    assert jnp.allclose(y2, _corr2d_reference(x2, k2, b2), atol=1e-5, rtol=1e-5)

    # Case 4: 3x3 kernel on a 128-wide input (lane-exact width, 2-step grid).
    k3 = jax.random.normal(k_w, (3, 3), dtype=jnp.float32)
    x3 = jax.random.normal(k_x, (70, 128), dtype=jnp.float32)
    y3 = conv2d_pallas(x3, k3, bias)
    jax.block_until_ready(y3)
    assert jnp.allclose(y3, _corr2d_reference(x3, k3, bias), atol=1e-4, rtol=1e-4)

    print("KERNEL_OK")
</pallas_src>

<mosaic_0001>
module attributes {stable_mosaic.version = 11 : i64} {
  func.func @kernel(%arg0: i32, %arg1: memref<16x128xf32, #tpu.memory_space<vmem>>, %arg2: memref<8x128xf32, #tpu.memory_space<vmem>>, %arg3: memref<2x2xf32, #tpu.memory_space<smem>>, %arg4: memref<1xf32, #tpu.memory_space<smem>>, %arg5: memref<16x128xf32, #tpu.memory_space<vmem>>) attributes {dimension_semantics = [#tpu.dimension_semantics<parallel>], iteration_bounds = array<i64: 2>, scalar_prefetch = 0 : i64, scratch_operands = 0 : i64, tpu.core_type = #tpu.core_type<tc>, window_params = [{transform_indices = @transform_0, window_bounds = array<i64: 16, 128>}, {transform_indices = @transform_1, window_bounds = array<i64: 8, 128>}, {transform_indices = @transform_2, window_bounds = array<i64: 2, 2>}, {transform_indices = @transform_3, window_bounds = array<i64: 1>}, {transform_indices = @transform_4, window_bounds = array<i64: 16, 128>}]} {
    %c0 = arith.constant 0 : index
    %c0_0 = arith.constant 0 : index
    %0 = memref.load %arg3[%c0, %c0_0] : memref<2x2xf32, #tpu.memory_space<smem>>
    %c0_1 = arith.constant 0 : index
    %c1 = arith.constant 1 : index
    %1 = memref.load %arg3[%c0_1, %c1] : memref<2x2xf32, #tpu.memory_space<smem>>
    %c1_2 = arith.constant 1 : index
    %c0_3 = arith.constant 0 : index
    %2 = memref.load %arg3[%c1_2, %c0_3] : memref<2x2xf32, #tpu.memory_space<smem>>
    %c1_4 = arith.constant 1 : index
    %c1_5 = arith.constant 1 : index
    %3 = memref.load %arg3[%c1_4, %c1_5] : memref<2x2xf32, #tpu.memory_space<smem>>
    %c0_6 = arith.constant 0 : index
    %4 = memref.load %arg4[%c0_6] : memref<1xf32, #tpu.memory_space<smem>>
    %c0_7 = arith.constant 0 : index
    %c0_8 = arith.constant 0 : index
    %5 = vector.load %arg1[%c0_7, %c0_8] : memref<16x128xf32, #tpu.memory_space<vmem>>, vector<16x128xf32>
    %c127_i32 = arith.constant 127 : i32
    %6 = tpu.dynamic_rotate %5 by %c127_i32 dim 1 : vector<16x128xf32>, i32 -> vector<16x128xf32>
    %7 = vector.broadcast %0 : f32 to vector<16x128xf32>
    %8 = arith.mulf %7, %5 : vector<16x128xf32>
    %9 = vector.broadcast %1 : f32 to vector<16x128xf32>
    %10 = arith.mulf %9, %6 : vector<16x128xf32>
    %11 = arith.addf %8, %10 : vector<16x128xf32>
    %12 = vector.broadcast %4 : f32 to vector<16x128xf32>
    %13 = arith.addf %11, %12 : vector<16x128xf32>
    %14 = vector.broadcast %2 : f32 to vector<16x128xf32>
    %15 = arith.mulf %14, %5 : vector<16x128xf32>
    %16 = vector.broadcast %3 : f32 to vector<16x128xf32>
    %17 = arith.mulf %16, %6 : vector<16x128xf32>
    %18 = arith.addf %15, %17 : vector<16x128xf32>
    %c15_i32 = arith.constant 15 : i32
    %19 = tpu.dynamic_rotate %18 by %c15_i32 dim 0 : vector<16x128xf32>, i32 -> vector<16x128xf32>
    %20 = arith.addf %13, %19 : vector<16x128xf32>
    %c0_9 = arith.constant 0 : index
    %c0_10 = arith.constant 0 : index
    %21 = vector.load %arg5[%c0_9, %c0_10] : memref<16x128xf32, #tpu.memory_space<vmem>>, vector<16x128xf32>
    tpu.vector_store %arg5[%c0_9, %c0_10], %20 {strides = array<i32>} : memref<16x128xf32, #tpu.memory_space<vmem>>, vector<16x128xf32>,
    %c8 = arith.constant 8 : index
    %c0_11 = arith.constant 0 : index
    %22 = vector.load %arg1[%c8, %c0_11] : memref<16x128xf32, #tpu.memory_space<vmem>>, vector<8x128xf32>
    %c0_12 = arith.constant 0 : index
    %c0_13 = arith.constant 0 : index
    %23 = vector.load %arg2[%c0_12, %c0_13] : memref<8x128xf32, #tpu.memory_space<vmem>>, vector<8x128xf32>
    %24 = tpu.concatenate %22, %23 in 0 : vector<8x128xf32>, vector<8x128xf32> -> vector<16x128xf32>
    %c127_i32_14 = arith.constant 127 : i32
    %25 = tpu.dynamic_rotate %24 by %c127_i32_14 dim 1 : vector<16x128xf32>, i32 -> vector<16x128xf32>
    %26 = vector.broadcast %0 : f32 to vector<16x128xf32>
    %27 = arith.mulf %26, %24 : vector<16x128xf32>
    %28 = vector.broadcast %1 : f32 to vector<16x128xf32>
    %29 = arith.mulf %28, %25 : vector<16x128xf32>
    %30 = arith.addf %27, %29 : vector<16x128xf32>
    %31 = vector.broadcast %4 : f32 to vector<16x128xf32>
    %32 = arith.addf %30, %31 : vector<16x128xf32>
    %33 = vector.broadcast %2 : f32 to vector<16x128xf32>
    %34 = arith.mulf %33, %24 : vector<16x128xf32>
    %35 = vector.broadcast %3 : f32 to vector<16x128xf32>
    %36 = arith.mulf %35, %25 : vector<16x128xf32>
    %37 = arith.addf %34, %36 : vector<16x128xf32>
    %c15_i32_15 = arith.constant 15 : i32
    %38 = tpu.dynamic_rotate %37 by %c15_i32_15 dim 0 : vector<16x128xf32>, i32 -> vector<16x128xf32>
    %39 = arith.addf %32, %38 : vector<16x128xf32>
    %40 = vector.extract_strided_slice %39 {offsets = [0, 0], sizes = [8, 128], strides = [1, 1]} : vector<16x128xf32> to vector<8x128xf32>
    %c8_16 = arith.constant 8 : index
    %c0_17 = arith.constant 0 : index
    %41 = vector.load %arg5[%c8_16, %c0_17] : memref<16x128xf32, #tpu.memory_space<vmem>>, vector<8x128xf32>
    tpu.vector_store %arg5[%c8_16, %c0_17], %40 {strides = array<i32>} : memref<16x128xf32, #tpu.memory_space<vmem>>, vector<8x128xf32>,
    return
  }
  func.func @transform_0(%arg0: i32) -> (i32, i32) {
    %c0_i32 = arith.constant 0 : i32
    %c0_i32_0 = arith.constant 0 : i32
    return %arg0, %c0_i32 : i32, i32
  }
  func.func @transform_1(%arg0: i32) -> (i32, i32) {
    %c1_i32 = arith.constant 1 : i32
    %0 = arith.addi %arg0, %c1_i32 : i32
    %c2_i32 = arith.constant 2 : i32
    %1 = arith.muli %0, %c2_i32 : i32
    %c3_i32 = arith.constant 3 : i32
    %2 = arith.minsi %1, %c3_i32 : i32
    %c0_i32 = arith.constant 0 : i32
    %c0_i32_0 = arith.constant 0 : i32
    return %2, %c0_i32 : i32, i32
  }
  func.func @transform_2(%arg0: i32) -> (i32, i32) {
    %c0_i32 = arith.constant 0 : i32
    %c0_i32_0 = arith.constant 0 : i32
    %c0_i32_1 = arith.constant 0 : i32
    return %c0_i32, %c0_i32_0 : i32, i32
  }
  func.func @transform_3(%arg0: i32) -> i32 {
    %c0_i32 = arith.constant 0 : i32
    %c0_i32_0 = arith.constant 0 : i32
    return %c0_i32 : i32
  }
  func.func @transform_4(%arg0: i32) -> (i32, i32) {
    %c0_i32 = arith.constant 0 : i32
    %c0_i32_0 = arith.constant 0 : i32
    return %arg0, %c0_i32 : i32, i32
  }
}

</mosaic_0001>

<llo_original>
// kernel: tpu_custom_call.1
$region0: #{tpu_custom_call.1}
  #allocation0 [shape = 'u32[]', space=smem, size = 0x4, offset = 0x4, fixed_abs, tag = 'smem constant byte address 0x4 - core index']
  #allocation1 [shape = 'u32[144,128]{1,0:T(1,128)}', space=vmem, size = 0x12000, scoped, tag = 'internal scratch']
  #allocation2 [shape = 'f32[1]{0:T(128)S(6)}', space=smem, size = 0x200, scoped, tag = 'scoped memory for tpu_custom_call.1']
  %s0 = inlined_call_operand.hbm [shape: f32[30,41], index: 0, kind: input, shape index: {}]
  %s1 = inlined_call_operand.hbm [shape: f32[30,41], index: 1, kind: input, shape index: {}]
  %s2 = inlined_call_operand.vmem [shape: f32[2,2], index: 2, kind: input, shape index: {}]
  %s3 = inlined_call_operand.<no memory space> [shape: f32[1], index: 3, kind: input, shape index: {}]
  %s4 = inlined_call_operand.hbm [shape: f32[29,40], index: 4, kind: output, shape index: {}]
  %s5 = sld [smem:[#allocation0]]
  $region61: #{tpu_custom_call.1} parent=0
    _
  %s7 = ssub.s32 1, %s5
  %s8 = scalar_select 0, %s7, %s5
  %9 = sst [smem:[#allocation2]] %s3
  $region1: #{tpu_custom_call.1} parent=0
    #allocation3 [shape = 'u8[16384]{0}', space=vmem, size = 0x4000, scoped, tag = 'input window, operand 0']
    #allocation4 [shape = 's32[2]{0}', space=sflag, size = 0x8, scoped, tag = 'scoped memory for tpu_custom_call.1']
    #allocation5 [shape = 's32[2]{0}', space=sflag, size = 0x8, scoped, tag = 'scoped memory for tpu_custom_call.1']
    #allocation6 [shape = 's32[2]{0}', space=sflag, size = 0x8, scoped, tag = 'scoped memory for tpu_custom_call.1']
    #allocation7 [shape = 'u8[8192]{0}', space=vmem, size = 0x2000, scoped, tag = 'input window, operand 1']
    #allocation8 [shape = 's32[2]{0}', space=sflag, size = 0x8, scoped, tag = 'scoped memory for tpu_custom_call.1']
    #allocation9 [shape = 'u8[1024]{0}', space=smem, size = 0x400, scoped, tag = 'input window, operand 2, single buffered']
    #allocation10 [shape = 'u8[16384]{0}', space=vmem, size = 0x4000, scoped, tag = 'output window, operand 0']
    %10 = vsyncpa [#allocation4], 0
    %s11 = scalar_lea.sflag [#allocation4], 1
    %12 = vsyncpa %s11, 0
    %13 = vsyncpa [#allocation8], 0
    %s14 = scalar_lea.sflag [#allocation8], 1
    %15 = vsyncpa %s14, 0
    %16 = vsyncpa [#allocation6], 0
    %17 = vsyncpa [#allocation5], 0
    %s18 = scalar_lea.sflag [#allocation5], 1
    %19 = vsyncpa %s18, 0
    loop: start=0, step=1, limit=4
    $region2: #{tpu_custom_call.1} parent=1 // loop_pre_header
      _
    $region3: #{tpu_custom_call.1} parent=1 // loop_header
      %s21 = sphi 0, %s25
      %p22 = scmp.ge.s32.totalorder %s21, 4
      %s31 = sphi 0, %s33
      %s34 = sphi 0, %s31
      %s35 = sphi 0, %s34
      %s51 = sphi 0, %s35
      %s65 = sphi 0, %s67
      %s68 = sphi 0, %s65
      %s69 = sphi 0, %s68
      %s85 = sphi 0, %s69
      %s89 = sphi 0, %s89
      %s91 = sphi 0, %s89
      %s92 = sphi 0, %s91
      %s106 = sphi 0, %s92
      %s110 = sphi 0, %s110
      %s112 = sphi 0, %s110
      %s113 = sphi 0, %s112
      %s127 = sphi 0, %s113
      %s133 = sphi 0, %s135
      %s136 = sphi 0, %s133
      %s137 = sphi 0, %s136
      %s153 = sphi 0, %s137
    $region4: #{tpu_custom_call.1} parent=1 // loop_header_branch
      %24 = sbr.rel (%p22) target = $region8
    $region5: #{tpu_custom_call.1} parent=1 // loop_body
      %s26 = ssub.s32 %s21, 1
      %s27 = ssub.s32 %s21, 2
      %s28 = sadd.s32 %s21, 1
      %s29 = ssub.s32 %s21, %s28
      %p30 = scmp.eq.s32.totalorder %s29, 0
      %s32 = sadd.s32 %s31, 1
      %s33 = scalar_select %p30, %s31, %s32
      %p36 = pneg %p30
      %p37 = scmp.eq.s32.totalorder %s21, 1
      %p38 = por %p36, %p37
      %p39 = scmp.ne.s32.totalorder %s31, %s34
      %p40 = scmp.eq.s32.totalorder %s21, 0
      %p41 = por %p39, %p40
      %p42 = scmp.ne.s32.totalorder %s31, %s34
      %p43 = scmp.eq.s32.totalorder %s26, 1
      %p44 = por %p42, %p43
      %p45 = scmp.ne.s32.totalorder %s34, %s35
      %p46 = scmp.eq.s32.totalorder %s26, 0
      %p47 = por %p45, %p46
      %p48 = scmp.ne.s32.totalorder %s34, %s35
      %p49 = scmp.eq.s32.totalorder %s27, 1
      %p50 = por %p48, %p49
      %p52 = scmp.ne.s32.totalorder %s35, %s51
      %p53 = scmp.eq.s32.totalorder %s27, 0
      %p54 = por %p52, %p53
      %s55 = sadd.s32 %s21, 1
      %s56 = smul.u32 %s55, 2
      %p57 = scmp.lt.s32.totalorder %s56, 3
      %s58 = scalar_select %p57, %s56, 3
      %s59 = sadd.s32 %s28, 1
      %s60 = smul.u32 %s59, 2
      %p61 = scmp.lt.s32.totalorder %s60, 3
      %s62 = scalar_select %p61, %s60, 3
      %s63 = ssub.s32 %s58, %s62
      %p64 = scmp.eq.s32.totalorder %s63, 0
      %s66 = sadd.s32 %s65, 1
      %s67 = scalar_select %p64, %s65, %s66
      %p70 = pneg %p64
      %p71 = scmp.eq.s32.totalorder %s21, 1
      %p72 = por %p70, %p71
      %p73 = scmp.ne.s32.totalorder %s65, %s68
      %p74 = scmp.eq.s32.totalorder %s21, 0
      %p75 = por %p73, %p74
      %p76 = scmp.ne.s32.totalorder %s65, %s68
      %p77 = scmp.eq.s32.totalorder %s26, 1
      %p78 = por %p76, %p77
      %p79 = scmp.ne.s32.totalorder %s68, %s69
      %p80 = scmp.eq.s32.totalorder %s26, 0
      %p81 = por %p79, %p80
      %p82 = scmp.ne.s32.totalorder %s68, %s69
      %p83 = scmp.eq.s32.totalorder %s27, 1
      %p84 = por %p82, %p83
      %p86 = scmp.ne.s32.totalorder %s69, %s85
      %p87 = scmp.eq.s32.totalorder %s27, 0
      %p88 = por %p86, %p87
      %s90 = sadd.s32 %s89, 1
      %p93 = scmp.eq.s32.totalorder %s21, 1
      %p94 = scmp.ne.s32.totalorder %s89, %s91
      %p95 = scmp.eq.s32.totalorder %s21, 0
      %p96 = por %p94, %p95
      %p97 = scmp.ne.s32.totalorder %s89, %s91
      %p98 = scmp.eq.s32.totalorder %s26, 1
      %p99 = por %p97, %p98
      %p100 = scmp.ne.s32.totalorder %s91, %s92
      %p101 = scmp.eq.s32.totalorder %s26, 0
      %p102 = por %p100, %p101
      %p103 = scmp.ne.s32.totalorder %s91, %s92
      %p104 = scmp.eq.s32.totalorder %s27, 1
      %p105 = por %p103, %p104
      %p107 = scmp.ne.s32.totalorder %s92, %s106
      %p108 = scmp.eq.s32.totalorder %s27, 0
      %p109 = por %p107, %p108
      %s111 = sadd.s32 %s110, 1
      %p114 = scmp.eq.s32.totalorder %s21, 1
      %p115 = scmp.ne.s32.totalorder %s110, %s112
      %p116 = scmp.eq.s32.totalorder %s21, 0
      %p117 = por %p115, %p116
      %p118 = scmp.ne.s32.totalorder %s110, %s112
      %p119 = scmp.eq.s32.totalorder %s26, 1
      %p120 = por %p118, %p119
      %p121 = scmp.ne.s32.totalorder %s112, %s113
      %p122 = scmp.eq.s32.totalorder %s26, 0
      %p123 = por %p121, %p122
      %p124 = scmp.ne.s32.totalorder %s112, %s113
      %p125 = scmp.eq.s32.totalorder %s27, 1
      %p126 = por %p124, %p125
      %p128 = scmp.ne.s32.totalorder %s113, %s127
      %p129 = scmp.eq.s32.totalorder %s27, 0
      %p130 = por %p128, %p129
      %s131 = ssub.s32 %s21, %s28
      %p132 = scmp.eq.s32.totalorder %s131, 0
      %s134 = sadd.s32 %s133, 1
      %s135 = scalar_select %p132, %s133, %s134
      %p138 = pneg %p132
      %p139 = scmp.eq.s32.totalorder %s21, 1
      %p140 = por %p138, %p139
      %p141 = scmp.ne.s32.totalorder %s133, %s136
      %p142 = scmp.eq.s32.totalorder %s21, 0
      %p143 = por %p141, %p142
      %p144 = scmp.ne.s32.totalorder %s133, %s136
      %p145 = scmp.eq.s32.totalorder %s26, 1
      %p146 = por %p144, %p145
      %p147 = scmp.ne.s32.totalorder %s136, %s137
      %p148 = scmp.eq.s32.totalorder %s26, 0
      %p149 = por %p147, %p148
      %p150 = scmp.ne.s32.totalorder %s136, %s137
      %p151 = scmp.eq.s32.totalorder %s27, 1
      %p152 = por %p150, %p151
      %p154 = scmp.ne.s32.totalorder %s137, %s153
      %p155 = scmp.eq.s32.totalorder %s27, 0
      %p156 = por %p154, %p155
      %p157 = scmp.le.s32.totalorder 1, %s21
      %p158 = scmp.lt.s32.totalorder %s21, 3
      %p159 = pnand %p157, %p158
      %p160 = pneg %p159
      // Predicated region
      $region9: #{tpu_custom_call.1} parent=5 // pred_check
        _
      $region10: #{tpu_custom_call.1} parent=5 // pred_check_branch
        %162 = sbr.rel (%p159) target = $region12
      $region11: #{tpu_custom_call.1} parent=5 // pred_region
        %s163 = ssub.s32 %s21, 1
        // Predicated region
        $region13: #{tpu_custom_call.1} parent=11 // pred_check
          %p164 = pneg %p102
        $region14: #{tpu_custom_call.1} parent=11 // pred_check_branch
          %166 = sbr.rel (%p164) target = $region16
        $region15: #{tpu_custom_call.1} parent=11 // pred_region
          %s168 = ssub.s32 32, 32
          %169 = vsyncadd [#allocation6], %s168
          %s171 = sshll.u32 %s2, 4
          %s172 = int_to_ptr.vmem [resolvable:$true] %s171
          %174 = dma.vmem_to_smem %s172, 32, [#allocation9], [#allocation6]
        $region16: #{tpu_custom_call.1} parent=11 // pred_fallthru
          _
        // Predicated region
        $region17: #{tpu_custom_call.1} parent=11 // pred_check
          %p175 = pneg %p123
        $region18: #{tpu_custom_call.1} parent=11 // pred_check_branch
          %177 = sbr.rel (%p175) target = $region20
        $region19: #{tpu_custom_call.1} parent=11 // pred_region
          _
        $region20: #{tpu_custom_call.1} parent=11 // pred_fallthru
          _
      $region12: #{tpu_custom_call.1} parent=5 // pred_fallthru
        _
      %p178 = scmp.lt.s32.totalorder %s21, 2
      // Predicated region
      $region21: #{tpu_custom_call.1} parent=5 // pred_check
        %p179 = pneg %p178
      $region22: #{tpu_custom_call.1} parent=5 // pred_check_branch
        %181 = sbr.rel (%p179) target = $region24
      $region23: #{tpu_custom_call.1} parent=5 // pred_region
        // Predicated region
        $region25: #{tpu_custom_call.1} parent=23 // pred_check
          %p182 = pneg %p41
        $region26: #{tpu_custom_call.1} parent=23 // pred_check_branch
          %184 = sbr.rel (%p182) target = $region28
        $region27: #{tpu_custom_call.1} parent=23 // pred_region
          %s185 = sand.u32 %s31, 1
          %s186 = scalar_lea.sflag [#allocation4], %s185
          %s187 = sand.u32 %s31, 1
          %s188 = smul.addr %s187, 16
          %s189 = scalar_lea.vmem [#allocation3], %s188
          %s190 = smul.u32 2, %s21
          %s192 = ssub.s32 256, 256
          %193 = vsyncadd %s186, %s192
          %s194 = smul.addr %s190, 128
          %s195 = scalar_lea.hbm %s0, %s194
          %s196 = sshll.u32 %s189, 4
          %s197 = int_to_ptr.vmem [resolvable:$true] %s196
          %202 = dma.hbm_to_vmem [thread:$0]  %s195, 256, %s197, %s186, 128, 128, 8
        $region28: #{tpu_custom_call.1} parent=23 // pred_fallthru
          _
        // Predicated region
        $region29: #{tpu_custom_call.1} parent=23 // pred_check
          %p203 = pneg %p75
        $region30: #{tpu_custom_call.1} parent=23 // pred_check_branch
          %205 = sbr.rel (%p203) target = $region32
        $region31: #{tpu_custom_call.1} parent=23 // pred_region
          %s206 = sand.u32 %s65, 1
          %s207 = scalar_lea.sflag [#allocation8], %s206
          %s208 = sand.u32 %s65, 1
          %s209 = smul.addr %s208, 8
          %s210 = scalar_lea.vmem [#allocation7], %s209
          %s211 = sadd.s32 %s21, 1
          %s212 = smul.u32 %s211, 2
          %p213 = scmp.lt.s32.totalorder %s212, 3
          %s214 = scalar_select %p213, %s212, 3
          %s216 = ssub.s32 128, 128
          %217 = vsyncadd %s207, %s216
          %s218 = smul.addr %s214, 128
          %s219 = scalar_lea.hbm %s1, %s218
          %s221 = sshll.u32 %s210, 4
          %s222 = int_to_ptr.vmem [resolvable:$true] %s221
          %224 = dma.hbm_to_vmem [thread:$0]  %s219, 128, %s222, %s207
        $region32: #{tpu_custom_call.1} parent=23 // pred_fallthru
          _
      $region24: #{tpu_custom_call.1} parent=5 // pred_fallthru
        _
      %p225 = scmp.le.s32.totalorder 1, %s21
      %p226 = scmp.lt.s32.totalorder %s21, 3
      %p227 = pnand %p225, %p226
      %p228 = pneg %p227
      // Predicated region
      $region33: #{tpu_custom_call.1} parent=5 // pred_check
        _
      $region34: #{tpu_custom_call.1} parent=5 // pred_check_branch
        %230 = sbr.rel (%p227) target = $region36
      $region35: #{tpu_custom_call.1} parent=5 // pred_region
        %s231 = ssub.s32 %s21, 1
        %s232 = sand.u32 %s34, 1
        %s233 = scalar_lea.sflag [#allocation4], %s232
        %s234 = sand.u32 %s34, 1
        %s235 = smul.addr %s234, 16
        %s236 = scalar_lea.vmem [#allocation3], %s235
        // Predicated region
        $region37: #{tpu_custom_call.1} parent=35 // pred_check
          %p237 = pneg %p47
        $region38: #{tpu_custom_call.1} parent=35 // pred_check_branch
          %239 = sbr.rel (%p237) target = $region40
        $region39: #{tpu_custom_call.1} parent=35 // pred_region
          %240 = dma.done %s233, 256
        $region40: #{tpu_custom_call.1} parent=35 // pred_fallthru
          _
        %s241 = sand.u32 %s68, 1
        %s242 = scalar_lea.sflag [#allocation8], %s241
        %s243 = sand.u32 %s68, 1
        %s244 = smul.addr %s243, 8
        %s245 = scalar_lea.vmem [#allocation7], %s244
        // Predicated region
        $region41: #{tpu_custom_call.1} parent=35 // pred_check
          %p246 = pneg %p81
        $region42: #{tpu_custom_call.1} parent=35 // pred_check_branch
          %248 = sbr.rel (%p246) target = $region44
        $region43: #{tpu_custom_call.1} parent=35 // pred_region
          %249 = dma.done %s242, 128
        $region44: #{tpu_custom_call.1} parent=35 // pred_fallthru
          _
        // Predicated region
        $region45: #{tpu_custom_call.1} parent=35 // pred_check
          %p250 = pneg %p102
        $region46: #{tpu_custom_call.1} parent=35 // pred_check_branch
          %252 = sbr.rel (%p250) target = $region48
        $region47: #{tpu_custom_call.1} parent=35 // pred_region
          %253 = dma.done [#allocation6], 32
        $region48: #{tpu_custom_call.1} parent=35 // pred_fallthru
          _
        %254 = sfence
        %s255 = sand.u32 %s34, 1
        %s256 = scalar_lea.sflag [#allocation4], %s255
        %s257 = sand.u32 %s34, 1
        %s258 = smul.addr %s257, 16
        %s259 = scalar_lea.vmem [#allocation3], %s258
        %p260 = pneg %p47
        %p261 = pneg %p44
        %s262 = sand.u32 %s68, 1
        %s263 = scalar_lea.sflag [#allocation8], %s262
        %s264 = sand.u32 %s68, 1
        %s265 = smul.addr %s264, 8
        %s266 = scalar_lea.vmem [#allocation7], %s265
        %p267 = pneg %p81
        %p268 = pneg %p78
        %p269 = pneg %p102
        %p270 = pneg %p99
        %p271 = pneg %p123
        %p272 = pneg %p120
        %p273 = pneg %p149
        %p274 = pneg %p146
        %s275 = sand.u32 %s136, 1
        %s276 = scalar_lea.sflag [#allocation5], %s275
        %s277 = sand.u32 %s136, 1
        %s278 = smul.addr %s277, 16
        %s279 = scalar_lea.vmem [#allocation10], %s278
        %s280 = smul.u32 2, %s26
        %s281 = sadd.s32 %s26, 1
        %s282 = smul.u32 %s281, 2
        %p283 = scmp.lt.s32.totalorder %s282, 3
        %s284 = scalar_select %p283, %s282, 3
        %s285 = smul.u32 2, %s26
        %s286 = sld [smem:[#allocation9]]
        %s287 = sld [smem:[#allocation9 + $0x1]]
        %s288 = sld [smem:[#allocation9 + $0x80]]
        %s289 = sld [smem:[#allocation9 + $0x81]]
        %s290 = sld [smem:[#allocation2]]
        %v291 = vld [vmem:[%s236] sm:$0xff]
        %v292 = vld [vmem:[%s236 + $0x8] sm:$0xff]
        %293 = vrot.lane.b32.xlu0 %v291, 127
        %v294 = vpop.permute.xlu0 %293
        %295 = vrot.lane.b32.xlu0 %v292, 127
        %v296 = vpop.permute.xlu0 %295
        %v297 = vstv %s286
        %v298 = vmul.f32 %v297, %v291
        %v299 = vmul.f32 %v297, %v292
        %v300 = vstv %s287
        %v301 = vmul.f32 %v300, %v294
        %v302 = vmul.f32 %v300, %v296
        %v303 = vadd.f32 %v298, %v301
        %v304 = vadd.f32 %v299, %v302
        %v305 = vstv %s290
        %v306 = vadd.f32 %v303, %v305
        %v307 = vadd.f32 %v304, %v305
        %v308 = vstv %s288
        %v309 = vmul.f32 %v308, %v291
        %v310 = vmul.f32 %v308, %v292
        %v311 = vstv %s289
        %v312 = vmul.f32 %v311, %v294
        %v313 = vmul.f32 %v311, %v296
        %v314 = vadd.f32 %v309, %v312
        %v315 = vadd.f32 %v310, %v313
        %v316 = vrot.slane %v314, 1
        %v317 = vrot.slane %v315, 1
        %v318 = vlaneseq
        %v319 = vshrl.u32 %v318, 7
        %vm320 = vcmp.lt.s32.totalorder %v319, 7
        %v321 = vsel %vm320, %v316, %v317
        %v322 = vsel %vm320, %v317, %v316
        %v323 = vadd.f32 %v306, %v321
        %v324 = vadd.f32 %v307, %v322
        %325 = vst [vmem:[%s279] sm:$0xff] %v323
        %326 = vst [vmem:[%s279 + $0x8] sm:$0xff] %v324
        %v327 = vld [vmem:[%s236 + $0x8] sm:$0xff]
        %v328 = vld [vmem:[%s245] sm:$0xff]
        %329 = vrot.lane.b32.xlu0 %v327, 127
        %v330 = vpop.permute.xlu0 %329
        %331 = vrot.lane.b32.xlu0 %v328, 127
        %v332 = vpop.permute.xlu0 %331
        %v333 = vmul.f32 %v297, %v327
        %v334 = vmul.f32 %v300, %v330
        %v335 = vadd.f32 %v333, %v334
        %v336 = vadd.f32 %v335, %v305
        %v337 = vmul.f32 %v308, %v327
        %v338 = vmul.f32 %v308, %v328
        %v339 = vmul.f32 %v311, %v330
        %v340 = vmul.f32 %v311, %v332
        %v341 = vadd.f32 %v337, %v339
        %v342 = vadd.f32 %v338, %v340
        %v343 = vrot.slane %v341, 1
        %v344 = vrot.slane %v342, 1
        %v345 = vsel %vm320, %v343, %v344
        %v346 = vadd.f32 %v336, %v345
        %347 = vst [vmem:[%s279 + $0x8] sm:$0xff] %v346
        %s348 = sand.u32 %s136, 1
        %s349 = scalar_lea.sflag [#allocation5], %s348
        %s350 = sand.u32 %s136, 1
        %s351 = smul.addr %s350, 16
        %s352 = scalar_lea.vmem [#allocation10], %s351
        // Predicated region
        $region49: #{tpu_custom_call.1} parent=35 // pred_check
          %p353 = pneg %p146
        $region50: #{tpu_custom_call.1} parent=35 // pred_check_branch
          %355 = sbr.rel (%p353) target = $region52
        $region51: #{tpu_custom_call.1} parent=35 // pred_region
          %s356 = smul.u32 2, %s26
          %s358 = ssub.s32 256, 256
          %359 = vsyncadd %s349, %s358
          %s360 = smul.addr %s356, 128
          %s361 = scalar_lea.hbm %s4, %s360
          %s362 = sshll.u32 %s352, 4
          %s363 = int_to_ptr.vmem [resolvable:$true] %s362
          %368 = dma.vmem_to_hbm [thread:$0]  %s363, 256, %s361, %s349, 128, 128, 8
        $region52: #{tpu_custom_call.1} parent=35 // pred_fallthru
          _
      $region36: #{tpu_custom_call.1} parent=5 // pred_fallthru
        _
      %p369 = scmp.le.s32.totalorder 2, %s21
      // Predicated region
      $region53: #{tpu_custom_call.1} parent=5 // pred_check
        %p370 = pneg %p369
      $region54: #{tpu_custom_call.1} parent=5 // pred_check_branch
        %372 = sbr.rel (%p370) target = $region56
      $region55: #{tpu_custom_call.1} parent=5 // pred_region
        %s373 = ssub.s32 %s21, 2
        // Predicated region
        $region57: #{tpu_custom_call.1} parent=55 // pred_check
          %p374 = pneg %p152
        $region58: #{tpu_custom_call.1} parent=55 // pred_check_branch
          %376 = sbr.rel (%p374) target = $region60
        $region59: #{tpu_custom_call.1} parent=55 // pred_region
          %s377 = sand.u32 %s137, 1
          %s378 = scalar_lea.sflag [#allocation5], %s377
          %s379 = sand.u32 %s137, 1
          %s380 = smul.addr %s379, 16
          %s381 = scalar_lea.vmem [#allocation10], %s380
          %382 = dma.done %s378, 256
        $region60: #{tpu_custom_call.1} parent=55 // pred_fallthru
          _
      $region56: #{tpu_custom_call.1} parent=5 // pred_fallthru
        _
    $region6: #{tpu_custom_call.1} parent=1 // loop_footer
      %s25 = sadd.s32 1, %s21
    $region7: #{tpu_custom_call.1} parent=1 // loop_footer_branch
      %20 = sbr.rel target = $region3
    $region8: #{tpu_custom_call.1} parent=1 // loop_exit
      _
    %383 = vsyncpa [#allocation4], 1
    %s384 = scalar_lea.sflag [#allocation4], 1
    %385 = vsyncpa %s384, 1
    %386 = vsyncpa [#allocation8], 1
    %s387 = scalar_lea.sflag [#allocation8], 1
    %388 = vsyncpa %s387, 1
    %389 = vsyncpa [#allocation5], 1
    %s390 = scalar_lea.sflag [#allocation5], 1
    %391 = vsyncpa %s390, 1
    %392 = vsyncpa [#allocation6], 1
    %s393 = scalar_lea.sflag [#allocation6], 1
    %394 = vsyncpa %s393, 1

</llo_original>
